<compile_context>
chip_gen: v7x
topology: tpu7x:2x2x1
jax: 0.10.0
libtpu: 0.0.40
codegen_flags: <defaults>
</compile_context>

<pallas_src>
import functools

import jax
import jax.numpy as jnp
from jax import lax
from jax.experimental import pallas as pl
from jax.experimental.pallas import tpu as pltpu

EPS_LOG = 1e-7    # matches the 1e-07 constants in the PyTorch code
EPS_NORM = 1e-8   # matches _l2_normalize's 1e-08


# ------------------------------ kernel body --------------------------------

def _sigmoid_exact(z):
    # exact sigmoid (used for `pred` and the final KL pass)
    return 1.0 / (1.0 + jnp.exp(-z))


def _l2n_approx(v):
    # d / (||d||_2 per-row + 1e-8); reciprocal on the EUP (direction only).
    nrm = jnp.sqrt(jnp.sum(v * v, axis=1, keepdims=True))
    return v * pl.reciprocal(nrm + EPS_NORM, approx=True)


def _fused_vat_kernel(x_ref, w_ref, b_ref, treat_ref, d0_ref, lds_ref,
                      *, xi, eps, ip, inv_count, c):
    x = x_ref[...]
    w = w_ref[...]
    b = b_ref[...]
    tile_n = x.shape[0]

    # mask = 1 - one_hot(treatment), built in-kernel (no [N,C] HBM input).
    col = lax.broadcasted_iota(jnp.int32, (tile_n, c), 1)
    mask = (col != treat_ref[...]).astype(jnp.float32)

    # pred = sigmoid(x @ W + b)   (torch.no_grad branch; exact math)
    pred = _sigmoid_exact(
        jnp.dot(x, w, preferred_element_type=jnp.float32) + b)
    omp = 1.0 - pred

    # d = _l2_normalize(rand - 0.5)
    d = _l2n_approx(d0_ref[...])

    def power_iter(_, d_cur):
        # forward through the perturbed point
        z = jnp.dot(x + xi * d_cur, w, preferred_element_type=jnp.float32) + b
        # EUP-path sigmoid/reciprocals: they only shape the adversarial
        # direction, which is re-normalized below, so approx recip is harmless.
        p_hat = pl.reciprocal(1.0 + jnp.exp(-z), approx=True)
        inv_1mph = pl.reciprocal(1.0 - p_hat + EPS_LOG, approx=True)
        inv_ph = pl.reciprocal(p_hat + EPS_LOG, approx=True)
        u = omp * inv_1mph + EPS_LOG
        v = pred * inv_ph + EPS_LOG
        # dKL/dp_hat, written as products of reciprocals (no divides, no pow)
        dkl_dphat = (omp * omp * pl.reciprocal(u, approx=True)
                     * inv_1mph * inv_1mph
                     - pred * pred * pl.reciprocal(v, approx=True)
                     * inv_ph * inv_ph)
        # chain: d(loss)/d(logit) = mask * inv_count * dKL/dp_hat * s'(z)
        #        d(logit)/d(d)    = xi * W^T
        g_z = mask * dkl_dphat * (p_hat * (1.0 - p_hat)) * (inv_count * xi)
        g = lax.dot_general(g_z, w,
                            dimension_numbers=(((1,), (1,)), ((), ())),
                            preferred_element_type=jnp.float32)
        return _l2n_approx(g)          # d = _l2_normalize(d.grad)

    d = lax.fori_loop(0, ip, power_iter, d, unroll=True)

    # final pass: lds = masked-mean KL(pred || sigmoid((x + eps*d) W + b))
    z = jnp.dot(x + eps * d, w, preferred_element_type=jnp.float32) + b
    p_hat = _sigmoid_exact(z)
    kl = (omp * jnp.log(omp / (1.0 - p_hat + EPS_LOG) + EPS_LOG)
          + pred * jnp.log(pred / (p_hat + EPS_LOG) + EPS_LOG))
    partial = jnp.sum(kl * mask) * inv_count

    # accumulate the scalar across batch tiles (output block is resident).
    @pl.when(pl.program_id(0) == 0)
    def _():
        lds_ref[0, 0] = 0.0
    lds_ref[0, 0] = lds_ref[0, 0] + partial


# ------------------------------ pallas wrapper ------------------------------

def _pick_tile(n):
    for t in (512, 256, 128, 64, 32, 16, 8):
        if n % t == 0:
            return t
    return n


def vat_loss(x, w, b, treatment, d0, *, xi=10.0, eps=1.0, ip=1):
    """Fused Pallas implementation of VATLoss.forward for a linear `model`."""
    n, dfeat = x.shape
    c = w.shape[1]
    b2 = b.reshape(1, c).astype(jnp.float32)
    t2 = treatment.astype(jnp.int32).reshape(n, 1)
    # mask has exactly one zero per row (scatter of ones), so count = N*(C-1).
    inv_count = 1.0 / float(n * (c - 1))

    tile_n = _pick_tile(n)
    grid = (n // tile_n,)

    kernel = functools.partial(
        _fused_vat_kernel, xi=float(xi), eps=float(eps), ip=int(ip),
        inv_count=inv_count, c=c)

    flops = int((2 + 2 * ip) * 2 * n * dfeat * c + 20 * (ip + 2) * n * c)
    transcendentals = int(3 * (ip + 2) * n * c)
    bytes_accessed = int(4 * (x.size + d0.size + w.size + c + n) + 4)

    out = pl.pallas_call(
        kernel,
        grid=grid,
        in_specs=[
            pl.BlockSpec((tile_n, dfeat), lambda i: (i, 0)),   # x
            pl.BlockSpec((dfeat, c), lambda i: (0, 0)),        # W
            pl.BlockSpec((1, c), lambda i: (0, 0)),            # b
            pl.BlockSpec((tile_n, 1), lambda i: (i, 0)),       # treatment (i32)
            pl.BlockSpec((tile_n, dfeat), lambda i: (i, 0)),   # d0
        ],
        out_specs=pl.BlockSpec((1, 1), lambda i: (0, 0),
                               memory_space=pltpu.MemorySpace.SMEM),
        out_shape=jax.ShapeDtypeStruct((1, 1), jnp.float32),
        compiler_params=pltpu.CompilerParams(
            dimension_semantics=("arbitrary",)),
        cost_estimate=pl.CostEstimate(flops=flops,
                                      transcendentals=transcendentals,
                                      bytes_accessed=bytes_accessed),
    )(x, w, b2, t2, d0)
    return out[0, 0]


# ------------------------- pure-JAX reference -------------------------------

def _kl_terms(p, p_hat):
    return ((1.0 - p) * jnp.log((1.0 - p) / (1.0 - p_hat + EPS_LOG) + EPS_LOG)
            + p * jnp.log(p / (p_hat + EPS_LOG) + EPS_LOG))


def _ref_vat_loss(x, w, b, treatment, d0, *, xi=10.0, eps=1.0, ip=1):
    c = w.shape[1]
    mask = 1.0 - jax.nn.one_hot(treatment, c, dtype=jnp.float32)
    count = mask.sum()

    def l2n(v):
        return v / (jnp.sqrt(jnp.sum(v * v, axis=1, keepdims=True)) + EPS_NORM)

    pred = jax.nn.sigmoid(x @ w + b[None, :])
    d = l2n(d0)

    def masked_kl(dd, scale):
        p_hat = jax.nn.sigmoid((x + scale * dd) @ w + b[None, :])
        return jnp.sum(_kl_terms(pred, p_hat) * mask) / count

    for _ in range(ip):
        g = jax.grad(lambda dd: masked_kl(dd, xi))(d)
        d = l2n(g)
    return masked_kl(d, eps)


# --------------------------------- main -------------------------------------

if __name__ == "__main__":
    def run_case(n, dfeat, c, seed=0, ip=1):
        key = jax.random.PRNGKey(seed)
        kx, kw, kb, kt, kd = jax.random.split(key, 5)
        x = jax.random.normal(kx, (n, dfeat), dtype=jnp.float32)
        # deterministic synthetic "model" parameters (nn.Linear(D, C) shapes)
        W = 0.2 * jax.random.normal(kw, (dfeat, c), dtype=jnp.float32)
        b = 0.1 * jax.random.normal(kb, (c,), dtype=jnp.float32)
        treatment = jax.random.randint(kt, (n,), 0, c, dtype=jnp.int32)
        # d = torch.rand(x.shape) - 0.5  (deterministic here)
        d0 = jax.random.uniform(kd, (n, dfeat), dtype=jnp.float32) - 0.5

        lds = jax.block_until_ready(
            vat_loss(x, W, b, treatment, d0, xi=10.0, eps=1.0, ip=ip))
        ref = jax.block_until_ready(
            _ref_vat_loss(x, W, b, treatment, d0, xi=10.0, eps=1.0, ip=ip))

        assert jnp.isfinite(lds), "lds is not finite"
        assert jnp.allclose(lds, ref, rtol=1e-2, atol=1e-3), (
            f"mismatch (n={n}): pallas={float(lds)} ref={float(ref)}")

    # module-sized example: N=8, D=32, C=4  (single tile, grid=(1,))
    run_case(8, 32, 4, seed=0, ip=1)
    # larger batch: exercises the tiled grid + accumulated SMEM scalar path
    run_case(1024, 32, 4, seed=1, ip=1)

    print("KERNEL_OK")
</pallas_src>

<mosaic_0001>
module attributes {stable_mosaic.version = 11 : i64} {
  func.func @_fused_vat_kernel(%arg0: i32, %arg1: memref<8x32xf32, #tpu.memory_space<vmem>>, %arg2: memref<32x4xf32, #tpu.memory_space<vmem>>, %arg3: memref<1x4xf32, #tpu.memory_space<vmem>>, %arg4: memref<8x1xi32, #tpu.memory_space<vmem>>, %arg5: memref<8x32xf32, #tpu.memory_space<vmem>>, %arg6: memref<1x1xf32, #tpu.memory_space<smem>>) attributes {dimension_semantics = [#tpu.dimension_semantics<arbitrary>], iteration_bounds = array<i64: 1>, scalar_prefetch = 0 : i64, scratch_operands = 0 : i64, tpu.core_type = #tpu.core_type<tc>, window_params = [{transform_indices = @transform_0, window_bounds = array<i64: 8, 32>}, {pipeline_mode = #tpu.pipeline_mode<synchronous>, transform_indices = @transform_1, window_bounds = array<i64: 32, 4>}, {pipeline_mode = #tpu.pipeline_mode<synchronous>, transform_indices = @transform_2, window_bounds = array<i64: 1, 4>}, {transform_indices = @transform_3, window_bounds = array<i64: 8, 1>}, {transform_indices = @transform_4, window_bounds = array<i64: 8, 32>}, {transform_indices = @transform_5, window_bounds = array<i64: 1, 1>}]} {
    %c0 = arith.constant 0 : index
    %c0_0 = arith.constant 0 : index
    %0 = vector.load %arg1[%c0, %c0_0] : memref<8x32xf32, #tpu.memory_space<vmem>>, vector<8x32xf32>
    %c0_1 = arith.constant 0 : index
    %c0_2 = arith.constant 0 : index
    %1 = vector.load %arg2[%c0_1, %c0_2] : memref<32x4xf32, #tpu.memory_space<vmem>>, vector<32x4xf32>
    %c0_3 = arith.constant 0 : index
    %c0_4 = arith.constant 0 : index
    %2 = vector.load %arg3[%c0_3, %c0_4] : memref<1x4xf32, #tpu.memory_space<vmem>>, vector<1x4xf32>
    %3 = tpu.iota {dimensions = array<i32: 1>} : vector<8x4xi32>
    %c0_5 = arith.constant 0 : index
    %c0_6 = arith.constant 0 : index
    %4 = vector.load %arg4[%c0_5, %c0_6] : memref<8x1xi32, #tpu.memory_space<vmem>>, vector<8x1xi32>
    %5 = vector.broadcast %4 : vector<8x1xi32> to vector<8x4xi32>
    %6 = arith.cmpi ne, %3, %5 : vector<8x4xi32>
    %7 = arith.extui %6 : vector<8x4xi1> to vector<8x4xi32>
    %8 = arith.sitofp %7 : vector<8x4xi32> to vector<8x4xf32>
    %cst = arith.constant dense<0.000000e+00> : vector<8x4xf32>
    %9 = tpu.matmul %0, %1, %cst {dimension_numbers = #tpu.dot_dimension_numbers<[1], [0], [0], [1], [0, 0, 1, 1], [], []>} : vector<8x32xf32>, vector<32x4xf32>, vector<8x4xf32> -> vector<8x4xf32>
    %10 = vector.broadcast %2 : vector<1x4xf32> to vector<8x4xf32>
    %11 = arith.addf %9, %10 : vector<8x4xf32>
    %cst_7 = arith.constant 0.000000e+00 : f32
    %12 = vector.broadcast %cst_7 : f32 to vector<8x4xf32>
    %13 = arith.subf %12, %11 : vector<8x4xf32>
    %14 = math.exp %13 : vector<8x4xf32>
    %cst_8 = arith.constant 1.000000e+00 : f32
    %15 = vector.broadcast %cst_8 : f32 to vector<8x4xf32>
    %16 = arith.addf %15, %14 : vector<8x4xf32>
    %cst_9 = arith.constant 1.000000e+00 : f32
    %17 = vector.broadcast %cst_9 : f32 to vector<8x4xf32>
    %18 = arith.divf %17, %16 : vector<8x4xf32>
    %cst_10 = arith.constant 1.000000e+00 : f32
    %19 = vector.broadcast %cst_10 : f32 to vector<8x4xf32>
    %20 = arith.subf %19, %18 : vector<8x4xf32>
    %c0_11 = arith.constant 0 : index
    %c0_12 = arith.constant 0 : index
    %21 = vector.load %arg5[%c0_11, %c0_12] : memref<8x32xf32, #tpu.memory_space<vmem>>, vector<8x32xf32>
    %22 = arith.mulf %21, %21 : vector<8x32xf32>
    %cst_13 = arith.constant dense<0.000000e+00> : vector<8xf32>
    %23 = vector.multi_reduction <add>, %22, %cst_13 [1] : vector<8x32xf32> to vector<8xf32>
    %24 = vector.shape_cast %23 : vector<8xf32> to vector<8x1xf32>
    %25 = math.sqrt %24 : vector<8x1xf32>
    %cst_14 = arith.constant 9.99999993E-9 : f32
    %26 = vector.broadcast %cst_14 : f32 to vector<8x1xf32>
    %27 = arith.addf %25, %26 : vector<8x1xf32>
    %28 = tpu.reciprocal %27 {approx = true} : vector<8x1xf32> -> vector<8x1xf32>
    %29 = vector.broadcast %28 : vector<8x1xf32> to vector<8x32xf32>
    %30 = arith.mulf %21, %29 : vector<8x32xf32>
    %c0_i32 = arith.constant 0 : i32
    %cst_15 = arith.constant 1.000000e+01 : f32
    %31 = vector.broadcast %cst_15 : f32 to vector<8x32xf32>
    %32 = arith.mulf %31, %30 : vector<8x32xf32>
    %33 = arith.addf %0, %32 : vector<8x32xf32>
    %cst_16 = arith.constant dense<0.000000e+00> : vector<8x4xf32>
    %34 = tpu.matmul %33, %1, %cst_16 {dimension_numbers = #tpu.dot_dimension_numbers<[1], [0], [0], [1], [0, 0, 1, 1], [], []>} : vector<8x32xf32>, vector<32x4xf32>, vector<8x4xf32> -> vector<8x4xf32>
    %35 = vector.broadcast %2 : vector<1x4xf32> to vector<8x4xf32>
    %36 = arith.addf %34, %35 : vector<8x4xf32>
    %cst_17 = arith.constant 0.000000e+00 : f32
    %37 = vector.broadcast %cst_17 : f32 to vector<8x4xf32>
    %38 = arith.subf %37, %36 : vector<8x4xf32>
    %39 = math.exp %38 : vector<8x4xf32>
    %cst_18 = arith.constant 1.000000e+00 : f32
    %40 = vector.broadcast %cst_18 : f32 to vector<8x4xf32>
    %41 = arith.addf %40, %39 : vector<8x4xf32>
    %42 = tpu.reciprocal %41 {approx = true} : vector<8x4xf32> -> vector<8x4xf32>
    %cst_19 = arith.constant 1.000000e+00 : f32
    %43 = vector.broadcast %cst_19 : f32 to vector<8x4xf32>
    %44 = arith.subf %43, %42 : vector<8x4xf32>
    %cst_20 = arith.constant 1.000000e-07 : f32
    %45 = vector.broadcast %cst_20 : f32 to vector<8x4xf32>
    %46 = arith.addf %44, %45 : vector<8x4xf32>
    %47 = tpu.reciprocal %46 {approx = true} : vector<8x4xf32> -> vector<8x4xf32>
    %cst_21 = arith.constant 1.000000e-07 : f32
    %48 = vector.broadcast %cst_21 : f32 to vector<8x4xf32>
    %49 = arith.addf %42, %48 : vector<8x4xf32>
    %50 = tpu.reciprocal %49 {approx = true} : vector<8x4xf32> -> vector<8x4xf32>
    %51 = arith.mulf %20, %47 : vector<8x4xf32>
    %cst_22 = arith.constant 1.000000e-07 : f32
    %52 = vector.broadcast %cst_22 : f32 to vector<8x4xf32>
    %53 = arith.addf %51, %52 : vector<8x4xf32>
    %54 = arith.mulf %18, %50 : vector<8x4xf32>
    %cst_23 = arith.constant 1.000000e-07 : f32
    %55 = vector.broadcast %cst_23 : f32 to vector<8x4xf32>
    %56 = arith.addf %54, %55 : vector<8x4xf32>
    %57 = arith.mulf %20, %20 : vector<8x4xf32>
    %58 = tpu.reciprocal %53 {approx = true} : vector<8x4xf32> -> vector<8x4xf32>
    %59 = arith.mulf %57, %58 : vector<8x4xf32>
    %60 = arith.mulf %59, %47 : vector<8x4xf32>
    %61 = arith.mulf %60, %47 : vector<8x4xf32>
    %62 = arith.mulf %18, %18 : vector<8x4xf32>
    %63 = tpu.reciprocal %56 {approx = true} : vector<8x4xf32> -> vector<8x4xf32>
    %64 = arith.mulf %62, %63 : vector<8x4xf32>
    %65 = arith.mulf %64, %50 : vector<8x4xf32>
    %66 = arith.mulf %65, %50 : vector<8x4xf32>
    %67 = arith.subf %61, %66 : vector<8x4xf32>
    %68 = arith.mulf %8, %67 : vector<8x4xf32>
    %cst_24 = arith.constant 1.000000e+00 : f32
    %69 = vector.broadcast %cst_24 : f32 to vector<8x4xf32>
    %70 = arith.subf %69, %42 : vector<8x4xf32>
    %71 = arith.mulf %42, %70 : vector<8x4xf32>
    %72 = arith.mulf %68, %71 : vector<8x4xf32>
    %cst_25 = arith.constant 0.416666657 : f32
    %73 = vector.broadcast %cst_25 : f32 to vector<8x4xf32>
    %74 = arith.mulf %72, %73 : vector<8x4xf32>
    %cst_26 = arith.constant dense<0.000000e+00> : vector<8x32xf32>
    %75 = tpu.matmul %74, %1, %cst_26 {dimension_numbers = #tpu.dot_dimension_numbers<[1], [1], [0], [0], [0, 0, 1, 0], [], []>} : vector<8x4xf32>, vector<32x4xf32>, vector<8x32xf32> -> vector<8x32xf32>
    %76 = arith.mulf %75, %75 : vector<8x32xf32>
    %cst_27 = arith.constant dense<0.000000e+00> : vector<8xf32>
    %77 = vector.multi_reduction <add>, %76, %cst_27 [1] : vector<8x32xf32> to vector<8xf32>
    %78 = vector.shape_cast %77 : vector<8xf32> to vector<8x1xf32>
    %79 = math.sqrt %78 : vector<8x1xf32>
    %cst_28 = arith.constant 9.99999993E-9 : f32
    %80 = vector.broadcast %cst_28 : f32 to vector<8x1xf32>
    %81 = arith.addf %79, %80 : vector<8x1xf32>
    %82 = tpu.reciprocal %81 {approx = true} : vector<8x1xf32> -> vector<8x1xf32>
    %83 = vector.broadcast %82 : vector<8x1xf32> to vector<8x32xf32>
    %84 = arith.mulf %75, %83 : vector<8x32xf32>
    %cst_29 = arith.constant 1.000000e+00 : f32
    %85 = vector.broadcast %cst_29 : f32 to vector<8x32xf32>
    %86 = arith.mulf %85, %84 : vector<8x32xf32>
    %87 = arith.addf %0, %86 : vector<8x32xf32>
    %cst_30 = arith.constant dense<0.000000e+00> : vector<8x4xf32>
    %88 = tpu.matmul %87, %1, %cst_30 {dimension_numbers = #tpu.dot_dimension_numbers<[1], [0], [0], [1], [0, 0, 1, 1], [], []>} : vector<8x32xf32>, vector<32x4xf32>, vector<8x4xf32> -> vector<8x4xf32>
    %89 = vector.broadcast %2 : vector<1x4xf32> to vector<8x4xf32>
    %90 = arith.addf %88, %89 : vector<8x4xf32>
    %cst_31 = arith.constant 0.000000e+00 : f32
    %91 = vector.broadcast %cst_31 : f32 to vector<8x4xf32>
    %92 = arith.subf %91, %90 : vector<8x4xf32>
    %93 = math.exp %92 : vector<8x4xf32>
    %cst_32 = arith.constant 1.000000e+00 : f32
    %94 = vector.broadcast %cst_32 : f32 to vector<8x4xf32>
    %95 = arith.addf %94, %93 : vector<8x4xf32>
    %cst_33 = arith.constant 1.000000e+00 : f32
    %96 = vector.broadcast %cst_33 : f32 to vector<8x4xf32>
    %97 = arith.divf %96, %95 : vector<8x4xf32>
    %cst_34 = arith.constant 1.000000e+00 : f32
    %98 = vector.broadcast %cst_34 : f32 to vector<8x4xf32>
    %99 = arith.subf %98, %97 : vector<8x4xf32>
    %cst_35 = arith.constant 1.000000e-07 : f32
    %100 = vector.broadcast %cst_35 : f32 to vector<8x4xf32>
    %101 = arith.addf %99, %100 : vector<8x4xf32>
    %102 = arith.divf %20, %101 : vector<8x4xf32>
    %cst_36 = arith.constant 1.000000e-07 : f32
    %103 = vector.broadcast %cst_36 : f32 to vector<8x4xf32>
    %104 = arith.addf %102, %103 : vector<8x4xf32>
    %105 = math.log %104 : vector<8x4xf32>
    %106 = arith.mulf %20, %105 : vector<8x4xf32>
    %cst_37 = arith.constant 1.000000e-07 : f32
    %107 = vector.broadcast %cst_37 : f32 to vector<8x4xf32>
    %108 = arith.addf %97, %107 : vector<8x4xf32>
    %109 = arith.divf %18, %108 : vector<8x4xf32>
    %cst_38 = arith.constant 1.000000e-07 : f32
    %110 = vector.broadcast %cst_38 : f32 to vector<8x4xf32>
    %111 = arith.addf %109, %110 : vector<8x4xf32>
    %112 = math.log %111 : vector<8x4xf32>
    %113 = arith.mulf %18, %112 : vector<8x4xf32>
    %114 = arith.addf %106, %113 : vector<8x4xf32>
    %115 = arith.mulf %114, %8 : vector<8x4xf32>
    %116 = vector.shape_cast %115 : vector<8x4xf32> to vector<1x8x4xf32>
    %cst_39 = arith.constant dense<0.000000e+00> : vector<1xf32>
    %117 = vector.multi_reduction <add>, %116, %cst_39 [1, 2] : vector<1x8x4xf32> to vector<1xf32>
    %118 = vector.shape_cast %117 : vector<1xf32> to vector<1x1x1xf32>
    %119 = vector.extract %118[0, 0, 0] : f32 from vector<1x1x1xf32>
    %cst_40 = arith.constant 0.0416666679 : f32
    %120 = arith.mulf %119, %cst_40 : f32
    %c0_i32_41 = arith.constant 0 : i32
    %121 = arith.cmpi eq, %arg0, %c0_i32_41 : i32
    %122 = arith.extui %121 : i1 to i32
    %c0_i32_42 = arith.constant 0 : i32
    %123 = arith.cmpi ne, %122, %c0_i32_42 : i32
    scf.if %123 {
      %cst_47 = arith.constant 0.000000e+00 : f32
      %c0_48 = arith.constant 0 : index
      %c0_49 = arith.constant 0 : index
      %127 = memref.load %arg6[%c0_48, %c0_49] : memref<1x1xf32, #tpu.memory_space<smem>>
      memref.store %cst_47, %arg6[%c0_48, %c0_49] : memref<1x1xf32, #tpu.memory_space<smem>>
    } else {
    }
    %c0_43 = arith.constant 0 : index
    %c0_44 = arith.constant 0 : index
    %124 = memref.load %arg6[%c0_43, %c0_44] : memref<1x1xf32, #tpu.memory_space<smem>>
    %125 = arith.addf %124, %120 : f32
    %c0_45 = arith.constant 0 : index
    %c0_46 = arith.constant 0 : index
    %126 = memref.load %arg6[%c0_45, %c0_46] : memref<1x1xf32, #tpu.memory_space<smem>>
    memref.store %125, %arg6[%c0_45, %c0_46] : memref<1x1xf32, #tpu.memory_space<smem>>
    return
  }
  func.func @transform_0(%arg0: i32) -> (i32, i32) {
    %c0_i32 = arith.constant 0 : i32
    %c0_i32_0 = arith.constant 0 : i32
    return %arg0, %c0_i32 : i32, i32
  }
  func.func @transform_1(%arg0: i32) -> (i32, i32) {
    %c0_i32 = arith.constant 0 : i32
    %c0_i32_0 = arith.constant 0 : i32
    %c0_i32_1 = arith.constant 0 : i32
    return %c0_i32, %c0_i32_0 : i32, i32
  }
  func.func @transform_2(%arg0: i32) -> (i32, i32) {
    %c0_i32 = arith.constant 0 : i32
    %c0_i32_0 = arith.constant 0 : i32
    %c0_i32_1 = arith.constant 0 : i32
    return %c0_i32, %c0_i32_0 : i32, i32
  }
  func.func @transform_3(%arg0: i32) -> (i32, i32) {
    %c0_i32 = arith.constant 0 : i32
    %c0_i32_0 = arith.constant 0 : i32
    return %arg0, %c0_i32 : i32, i32
  }
  func.func @transform_4(%arg0: i32) -> (i32, i32) {
    %c0_i32 = arith.constant 0 : i32
    %c0_i32_0 = arith.constant 0 : i32
    return %arg0, %c0_i32 : i32, i32
  }
  func.func @transform_5(%arg0: i32) -> (i32, i32) {
    %c0_i32 = arith.constant 0 : i32
    %c0_i32_0 = arith.constant 0 : i32
    %c0_i32_1 = arith.constant 0 : i32
    return %c0_i32, %c0_i32_0 : i32, i32
  }
}

</mosaic_0001>

<llo_original>
// kernel: tpu_custom_call.1
$region0: #{tpu_custom_call.1}
  #allocation0 [shape = 'u32[]', space=smem, size = 0x4, offset = 0x4, fixed_abs, tag = 'smem constant byte address 0x4 - core index']
  #allocation1 [shape = 'u32[144,128]{1,0:T(1,128)}', space=vmem, size = 0x12000, scoped, tag = 'internal scratch']
  %s0 = inlined_call_operand.vmem [shape: f32[8,32], index: 0, kind: input, shape index: {}]
  %s1 = inlined_call_operand.vmem [shape: f32[32,4], index: 1, kind: input, shape index: {}]
  %s2 = inlined_call_operand.vmem [shape: f32[1,4], index: 2, kind: input, shape index: {}]
  %s3 = inlined_call_operand.vmem [shape: s32[8,1], index: 3, kind: input, shape index: {}]
  %s4 = inlined_call_operand.vmem [shape: f32[8,32], index: 4, kind: input, shape index: {}]
  %s5 = inlined_call_operand.hbm [shape: f32[1,1], index: 5, kind: output, shape index: {}]
  %s6 = sld [smem:[#allocation0]]
  $region34: #{tpu_custom_call.1} parent=0
    _
  %s8 = ssub.s32 1, %s6
  %s9 = scalar_select 0, %s8, %s6
  $region1: #{tpu_custom_call.1} parent=0
    #allocation2 [shape = 'u8[512]{0}', space=smem, size = 0x200, scoped, tag = 'output window, operand 0, single buffered']
    #allocation3 [shape = 's32[1]{0}', space=sflag, size = 0x4, scoped, tag = 'scoped memory for tpu_custom_call.1']
    %10 = vsyncpa [#allocation3], 0
    // Predicated region
    $region2: #{tpu_custom_call.1} parent=1 // pred_check
      _
    $region3: #{tpu_custom_call.1} parent=1 // pred_check_branch
      %12 = sbr.rel (0) target = $region5
    $region4: #{tpu_custom_call.1} parent=1 // pred_region
      _
    $region5: #{tpu_custom_call.1} parent=1 // pred_fallthru
      _
    // Predicated region
    $region6: #{tpu_custom_call.1} parent=1 // pred_check
      _
    $region7: #{tpu_custom_call.1} parent=1 // pred_check_branch
      %14 = sbr.rel (0) target = $region9
    $region8: #{tpu_custom_call.1} parent=1 // pred_region
      _
    $region9: #{tpu_custom_call.1} parent=1 // pred_fallthru
      _
    // Predicated region
    $region10: #{tpu_custom_call.1} parent=1 // pred_check
      _
    $region11: #{tpu_custom_call.1} parent=1 // pred_check_branch
      %16 = sbr.rel (0) target = $region13
    $region12: #{tpu_custom_call.1} parent=1 // pred_region
      _
    $region13: #{tpu_custom_call.1} parent=1 // pred_fallthru
      _
    // Predicated region
    $region14: #{tpu_custom_call.1} parent=1 // pred_check
      _
    $region15: #{tpu_custom_call.1} parent=1 // pred_check_branch
      %18 = sbr.rel (0) target = $region17
    $region16: #{tpu_custom_call.1} parent=1 // pred_region
      _
    $region17: #{tpu_custom_call.1} parent=1 // pred_fallthru
      _
    // Predicated region
    $region18: #{tpu_custom_call.1} parent=1 // pred_check
      _
    $region19: #{tpu_custom_call.1} parent=1 // pred_check_branch
      %20 = sbr.rel (0) target = $region21
    $region20: #{tpu_custom_call.1} parent=1 // pred_region
      _
    $region21: #{tpu_custom_call.1} parent=1 // pred_fallthru
      _
    %v21 = vld [vmem:[%s0] sm:$0xff]
    %v22 = vld [vmem:[%s1] sm:$0xff]
    %v23 = vld [vmem:[%s1 + $0x8] sm:$0xff]
    %v24 = vld [vmem:[%s1 + $0x10] sm:$0xff]
    %v25 = vld [vmem:[%s1 + $0x18] sm:$0xff]
    %v26 = vld [vmem:[%s2] sm:$0x1]
    %v27 = vlaneseq
    %v28 = vand.u32 %v27, 127
    %v29 = vld [vmem:[%s3] sm:$0xff]
    %30 = vset.pattern.permute.xlu0 0
    %31 = vperm.xlu0 %30, %v29
    %v32 = vpop.permute.xlu0 %31
    %vm33 = vcmp.ne.s32.totalorder %v28, %v32
    %v34 = vsel %vm33, 1, 0
    %v35 = vcvt.s32.f32 %v34
    %v37 = vlaneseq
    %v38 = vshrl.u32 %v37, 7
    %v39 = vsub.s32 0, %v38
    %v40 = vrot.slane %v26, %v39
    %vm42 = vcmask 261120
    %v44 = vsel %vm42, %v21, 0
    %46 = vmatprep.subr.mxu0 0.0
    %47 = vmatpush1.msra.mxu0 %v22
    %48 = vmatprep.subr.mxu0 0.0
    %49 = vmatpush1.msra.mxu0 %v23
    %50 = vmatprep.subr.mxu0 0.0
    %51 = vmatpush1.msra.mxu0 %v24
    %52 = vmatprep.subr.mxu0 0.0
    %53 = vmatpush1.msra.mxu0 %v25
    %54 = vmatprep.subr.mxu0 0.0
    %55 = vmatpush1.msra.mxu0 0.0
    %56 = vmatprep.subr.mxu0 0.0
    %57 = vmatpush1.msra.mxu0 0.0
    %58 = vmatprep.subr.mxu0 0.0
    %59 = vmatpush1.msra.mxu0 0.0
    %60 = vmatprep.subr.mxu0 0.0
    %61 = vmatpush1.msra.mxu0 0.0
    %62 = vmatprep.subr.mxu0 0.0
    %63 = vmatpush1.msra.mxu0 0.0
    %64 = vmatprep.subr.mxu0 0.0
    %65 = vmatpush1.msra.mxu0 0.0
    %66 = vmatprep.subr.mxu0 0.0
    %67 = vmatpush1.msra.mxu0 0.0
    %68 = vmatprep.subr.mxu0 0.0
    %69 = vmatpush1.msra.mxu0 0.0
    %70 = vmatprep.subr.mxu0 0.0
    %71 = vmatpush1.msra.mxu0 0.0
    %72 = vmatprep.subr.mxu0 0.0
    %73 = vmatpush1.msra.mxu0 0.0
    %74 = vmatprep.subr.mxu0 0.0
    %75 = vmatpush1.msra.mxu0 0.0
    %76 = vmatprep.subr.mxu0 0.0
    %77 = vmatpush1.msra.mxu0 0.0
    %78 = vmatprep.subr.mxu0 0.0
    %79 = vmatpush1.msra.mxu0 0.0
    %80 = vmatprep.subr.mxu0 0.0
    %81 = vmatpush1.msra.mxu0 0.0
    %82 = vmatprep.subr.mxu0 0.0
    %83 = vmatpush1.msra.mxu0 0.0
    %84 = vmatprep.subr.mxu0 0.0
    %85 = vmatpush1.msra.mxu0 0.0
    %86 = vmatprep.subr.mxu0 0.0
    %87 = vmatpush1.msra.mxu0 0.0
    %88 = vmatprep.subr.mxu0 0.0
    %89 = vmatpush1.msra.mxu0 0.0
    %90 = vmatprep.subr.mxu0 0.0
    %91 = vmatpush1.msra.mxu0 0.0
    %92 = vmatprep.subr.mxu0 0.0
    %93 = vmatpush1.msra.mxu0 0.0
    %94 = vmatprep.subr.mxu0 0.0
    %95 = vmatpush1.msra.mxu0 0.0
    %96 = vmatprep.subr.mxu0 0.0
    %97 = vmatpush1.msra.mxu0 0.0
    %98 = vmatprep.subr.mxu0 0.0
    %99 = vmatpush1.msra.mxu0 0.0
    %100 = vmatprep.subr.mxu0 0.0
    %101 = vmatpush1.msra.mxu0 0.0
    %102 = vmatprep.subr.mxu0 0.0
    %103 = vmatpush1.msra.mxu0 0.0
    %104 = vmatprep.subr.mxu0 0.0
    %105 = vmatpush1.msra.mxu0 0.0
    %106 = vmatprep.subr.mxu0 0.0
    %107 = vmatpush1.msra.mxu0 0.0
    %108 = vmatprep.subr.mxu0 0.0
    %109 = vmatpush1.msra.mxu0 0.0
    %110 = vmatprep.mubr.f32.mxu0 0.0
    %111 = vmatmul.mubr.f32.gmra.mrb[0].mxu0 %v44
    %v112 = vpop.f32.mrb[0].mxu0
    %v113 = vadd.f32 %v40, %v112
    %v114 = vpop.f32.mrb[0].mxu0
    %115 = vdwg.mxu0
    %v116 = vsub.f32 0.0, %v113
    %v117 = vmul.f32 %v116, 1.442695
    %v118 = vpow.pop %v117
    %v119 = vadd.f32 %v118, 1.0
    %v120 = vrcp.pop %v119
    %v121 = vmul.f32 1.0, %v120
    %v122 = vsub.f32 1.0, %v121
    %v123 = vld [vmem:[%s4] sm:$0xff]
    %v124 = vmul.f32 %v123, %v123
    %v125 = vsel %vm42, %v124, 0.0
    %126 = vadd.xlane.f32.xlu0 %v125
    %v127 = vpop.xlane.xlu0 %126
    %v128 = vrsqrt.pop %v127
    %v129 = vmul.f32 %v127, %v128
    %vm130 = vcmp.eq.f32.partialorder %v127, inf
    %v131 = vsel %vm130, %v127, %v129
    %vm132 = vcmp.eq.f32.partialorder %v127, 0.0
    %v133 = vand.u32 %v127, 2147483648
    %v134 = vsel %vm132, %v133, %v131
    %v135 = vadd.f32 %v134, 1e-08
    %v136 = vrcp.pop %v135
    %v137 = vmul.f32 %v123, %v136
    %v138 = vmul.f32 %v137, 10.0
    %v139 = vadd.f32 %v21, %v138
    %v141 = vsel %vm42, %v139, 0
    %143 = vmatprep.subr.mxu0 0.0
    %144 = vmatpush1.msra.mxu0 %v22
    %145 = vmatprep.subr.mxu0 0.0
    %146 = vmatpush1.msra.mxu0 %v23
    %147 = vmatprep.subr.mxu0 0.0
    %148 = vmatpush1.msra.mxu0 %v24
    %149 = vmatprep.subr.mxu0 0.0
    %150 = vmatpush1.msra.mxu0 %v25
    %151 = vmatprep.subr.mxu0 0.0
    %152 = vmatpush1.msra.mxu0 0.0
    %153 = vmatprep.subr.mxu0 0.0
    %154 = vmatpush1.msra.mxu0 0.0
    %155 = vmatprep.subr.mxu0 0.0
    %156 = vmatpush1.msra.mxu0 0.0
    %157 = vmatprep.subr.mxu0 0.0
    %158 = vmatpush1.msra.mxu0 0.0
    %159 = vmatprep.subr.mxu0 0.0
    %160 = vmatpush1.msra.mxu0 0.0
    %161 = vmatprep.subr.mxu0 0.0
    %162 = vmatpush1.msra.mxu0 0.0
    %163 = vmatprep.subr.mxu0 0.0
    %164 = vmatpush1.msra.mxu0 0.0
    %165 = vmatprep.subr.mxu0 0.0
    %166 = vmatpush1.msra.mxu0 0.0
    %167 = vmatprep.subr.mxu0 0.0
    %168 = vmatpush1.msra.mxu0 0.0
    %169 = vmatprep.subr.mxu0 0.0
    %170 = vmatpush1.msra.mxu0 0.0
    %171 = vmatprep.subr.mxu0 0.0
    %172 = vmatpush1.msra.mxu0 0.0
    %173 = vmatprep.subr.mxu0 0.0
    %174 = vmatpush1.msra.mxu0 0.0
    %175 = vmatprep.subr.mxu0 0.0
    %176 = vmatpush1.msra.mxu0 0.0
    %177 = vmatprep.subr.mxu0 0.0
    %178 = vmatpush1.msra.mxu0 0.0
    %179 = vmatprep.subr.mxu0 0.0
    %180 = vmatpush1.msra.mxu0 0.0
    %181 = vmatprep.subr.mxu0 0.0
    %182 = vmatpush1.msra.mxu0 0.0
    %183 = vmatprep.subr.mxu0 0.0
    %184 = vmatpush1.msra.mxu0 0.0
    %185 = vmatprep.subr.mxu0 0.0
    %186 = vmatpush1.msra.mxu0 0.0
    %187 = vmatprep.subr.mxu0 0.0
    %188 = vmatpush1.msra.mxu0 0.0
    %189 = vmatprep.subr.mxu0 0.0
    %190 = vmatpush1.msra.mxu0 0.0
    %191 = vmatprep.subr.mxu0 0.0
    %192 = vmatpush1.msra.mxu0 0.0
    %193 = vmatprep.subr.mxu0 0.0
    %194 = vmatpush1.msra.mxu0 0.0
    %195 = vmatprep.subr.mxu0 0.0
    %196 = vmatpush1.msra.mxu0 0.0
    %197 = vmatprep.subr.mxu0 0.0
    %198 = vmatpush1.msra.mxu0 0.0
    %199 = vmatprep.subr.mxu0 0.0
    %200 = vmatpush1.msra.mxu0 0.0
    %201 = vmatprep.subr.mxu0 0.0
    %202 = vmatpush1.msra.mxu0 0.0
    %203 = vmatprep.subr.mxu0 0.0
    %204 = vmatpush1.msra.mxu0 0.0
    %205 = vmatprep.subr.mxu0 0.0
    %206 = vmatpush1.msra.mxu0 0.0
    %207 = vmatprep.mubr.f32.mxu0 0.0
    %208 = vmatmul.mubr.f32.gmra.mrb[0].mxu0 %v141
    %v209 = vpop.f32.mrb[0].mxu0
    %v210 = vadd.f32 %v40, %v209
    %v211 = vpop.f32.mrb[0].mxu0
    %212 = vdwg.mxu0
    %v213 = vsub.f32 0.0, %v210
    %v214 = vmul.f32 %v213, 1.442695
    %v215 = vpow.pop %v214
    %v216 = vadd.f32 %v215, 1.0
    %v217 = vrcp.pop %v216
    %v218 = vsub.f32 1.0, %v217
    %v219 = vadd.f32 %v218, 1e-07
    %v220 = vrcp.pop %v219
    %v221 = vadd.f32 %v217, 1e-07
    %v222 = vrcp.pop %v221
    %v223 = vmul.f32 %v122, %v220
    %v224 = vadd.f32 %v223, 1e-07
    %v225 = vmul.f32 %v121, %v222
    %v226 = vadd.f32 %v225, 1e-07
    %v227 = vmul.f32 %v122, %v122
    %v228 = vrcp.pop %v224
    %v229 = vmul.f32 %v227, %v228
    %v230 = vmul.f32 %v229, %v220
    %v231 = vmul.f32 %v230, %v220
    %v232 = vmul.f32 %v121, %v121
    %v233 = vrcp.pop %v226
    %v234 = vmul.f32 %v232, %v233
    %v235 = vmul.f32 %v234, %v222
    %v236 = vmul.f32 %v235, %v222
    %v237 = vsub.f32 %v231, %v236
    %v238 = vmul.f32 %v35, %v237
    %v239 = vmul.f32 %v217, %v218
    %v240 = vmul.f32 %v238, %v239
    %v241 = vmul.f32 %v240, 0.41666666
    %vm242 = vcmask 31744
    %v244 = vsel %vm242, %v241, 0
    %v247 = vsel %vm242, %v22, 0
    %v250 = vsel %vm242, %v23, 0
    %v253 = vsel %vm242, %v24, 0
    %v256 = vsel %vm242, %v25, 0
    %258 = vmatprep.subr.mxu0 0.0
    %259 = vmatpush1.xpose.msra.mxu0 %v247
    %260 = vmatprep.subr.mxu0 0.0
    %261 = vmatpush1.xpose.msra.mxu0 %v250
    %262 = vmatprep.subr.mxu0 0.0
    %263 = vmatpush1.xpose.msra.mxu0 %v253
    %264 = vmatprep.subr.mxu0 0.0
    %265 = vmatpush1.xpose.msra.mxu0 %v256
    %266 = vmatprep.subr.mxu0 0.0
    %267 = vmatpush1.xpose.msra.mxu0 0.0
    %268 = vmatprep.subr.mxu0 0.0
    %269 = vmatpush1.xpose.msra.mxu0 0.0
    %270 = vmatprep.subr.mxu0 0.0
    %271 = vmatpush1.xpose.msra.mxu0 0.0
    %272 = vmatprep.subr.mxu0 0.0
    %273 = vmatpush1.xpose.msra.mxu0 0.0
    %274 = vmatprep.subr.mxu0 0.0
    %275 = vmatpush1.xpose.msra.mxu0 0.0
    %276 = vmatprep.subr.mxu0 0.0
    %277 = vmatpush1.xpose.msra.mxu0 0.0
    %278 = vmatprep.subr.mxu0 0.0
    %279 = vmatpush1.xpose.msra.mxu0 0.0
    %280 = vmatprep.subr.mxu0 0.0
    %281 = vmatpush1.xpose.msra.mxu0 0.0
    %282 = vmatprep.subr.mxu0 0.0
    %283 = vmatpush1.xpose.msra.mxu0 0.0
    %284 = vmatprep.subr.mxu0 0.0
    %285 = vmatpush1.xpose.msra.mxu0 0.0
    %286 = vmatprep.subr.mxu0 0.0
    %287 = vmatpush1.xpose.msra.mxu0 0.0
    %288 = vmatprep.subr.mxu0 0.0
    %289 = vmatpush1.xpose.msra.mxu0 0.0
    %290 = vmatprep.subr.mxu0 0.0
    %291 = vmatpush1.xpose.msra.mxu0 0.0
    %292 = vmatprep.subr.mxu0 0.0
    %293 = vmatpush1.xpose.msra.mxu0 0.0
    %294 = vmatprep.subr.mxu0 0.0
    %295 = vmatpush1.xpose.msra.mxu0 0.0
    %296 = vmatprep.subr.mxu0 0.0
    %297 = vmatpush1.xpose.msra.mxu0 0.0
    %298 = vmatprep.subr.mxu0 0.0
    %299 = vmatpush1.xpose.msra.mxu0 0.0
    %300 = vmatprep.subr.mxu0 0.0
    %301 = vmatpush1.xpose.msra.mxu0 0.0
    %302 = vmatprep.subr.mxu0 0.0
    %303 = vmatpush1.xpose.msra.mxu0 0.0
    %304 = vmatprep.subr.mxu0 0.0
    %305 = vmatpush1.xpose.msra.mxu0 0.0
    %306 = vmatprep.subr.mxu0 0.0
    %307 = vmatpush1.xpose.msra.mxu0 0.0
    %308 = vmatprep.subr.mxu0 0.0
    %309 = vmatpush1.xpose.msra.mxu0 0.0
    %310 = vmatprep.subr.mxu0 0.0
    %311 = vmatpush1.xpose.msra.mxu0 0.0
    %312 = vmatprep.subr.mxu0 0.0
    %313 = vmatpush1.xpose.msra.mxu0 0.0
    %314 = vmatprep.subr.mxu0 0.0
    %315 = vmatpush1.xpose.msra.mxu0 0.0
    %316 = vmatprep.subr.mxu0 0.0
    %317 = vmatpush1.xpose.msra.mxu0 0.0
    %318 = vmatprep.subr.mxu0 0.0
    %319 = vmatpush1.xpose.msra.mxu0 0.0
    %320 = vmatprep.subr.mxu0 0.0
    %321 = vmatpush1.xpose.msra.mxu0 0.0
    %322 = vmatprep.mubr.f32.mxu0 0.0
    %323 = vmatmul.mubr.f32.gmra.mrb[0].mxu0 %v244
    %v324 = vpop.f32.mrb[0].mxu0
    %v325 = vadd.f32 0.0, %v324
    %v326 = vpop.f32.mrb[0].mxu0
    %327 = vdwg.mxu0
    %v328 = vmul.f32 %v325, %v325
    %v329 = vsel %vm42, %v328, 0.0
    %330 = vadd.xlane.f32.xlu0 %v329
    %v331 = vpop.xlane.xlu0 %330
    %v332 = vrsqrt.pop %v331
    %v333 = vmul.f32 %v331, %v332
    %vm334 = vcmp.eq.f32.partialorder %v331, inf
    %v335 = vsel %vm334, %v331, %v333
    %vm336 = vcmp.eq.f32.partialorder %v331, 0.0
    %v337 = vand.u32 %v331, 2147483648
    %v338 = vsel %vm336, %v337, %v335
    %v339 = vadd.f32 %v338, 1e-08
    %v340 = vrcp.pop %v339
    %v341 = vmul.f32 %v325, %v340
    %v342 = vadd.f32 %v21, %v341
    %v344 = vsel %vm42, %v342, 0
    %346 = vmatprep.subr.mxu0 0.0
    %347 = vmatpush1.msra.mxu0 %v22
    %348 = vmatprep.subr.mxu0 0.0
    %349 = vmatpush1.msra.mxu0 %v23
    %350 = vmatprep.subr.mxu0 0.0
    %351 = vmatpush1.msra.mxu0 %v24
    %352 = vmatprep.subr.mxu0 0.0
    %353 = vmatpush1.msra.mxu0 %v25
    %354 = vmatprep.subr.mxu0 0.0
    %355 = vmatpush1.msra.mxu0 0.0
    %356 = vmatprep.subr.mxu0 0.0
    %357 = vmatpush1.msra.mxu0 0.0
    %358 = vmatprep.subr.mxu0 0.0
    %359 = vmatpush1.msra.mxu0 0.0
    %360 = vmatprep.subr.mxu0 0.0
    %361 = vmatpush1.msra.mxu0 0.0
    %362 = vmatprep.subr.mxu0 0.0
    %363 = vmatpush1.msra.mxu0 0.0
    %364 = vmatprep.subr.mxu0 0.0
    %365 = vmatpush1.msra.mxu0 0.0
    %366 = vmatprep.subr.mxu0 0.0
    %367 = vmatpush1.msra.mxu0 0.0
    %368 = vmatprep.subr.mxu0 0.0
    %369 = vmatpush1.msra.mxu0 0.0
    %370 = vmatprep.subr.mxu0 0.0
    %371 = vmatpush1.msra.mxu0 0.0
    %372 = vmatprep.subr.mxu0 0.0
    %373 = vmatpush1.msra.mxu0 0.0
    %374 = vmatprep.subr.mxu0 0.0
    %375 = vmatpush1.msra.mxu0 0.0
    %376 = vmatprep.subr.mxu0 0.0
    %377 = vmatpush1.msra.mxu0 0.0
    %378 = vmatprep.subr.mxu0 0.0
    %379 = vmatpush1.msra.mxu0 0.0
    %380 = vmatprep.subr.mxu0 0.0
    %381 = vmatpush1.msra.mxu0 0.0
    %382 = vmatprep.subr.mxu0 0.0
    %383 = vmatpush1.msra.mxu0 0.0
    %384 = vmatprep.subr.mxu0 0.0
    %385 = vmatpush1.msra.mxu0 0.0
    %386 = vmatprep.subr.mxu0 0.0
    %387 = vmatpush1.msra.mxu0 0.0
    %388 = vmatprep.subr.mxu0 0.0
    %389 = vmatpush1.msra.mxu0 0.0
    %390 = vmatprep.subr.mxu0 0.0
    %391 = vmatpush1.msra.mxu0 0.0
    %392 = vmatprep.subr.mxu0 0.0
    %393 = vmatpush1.msra.mxu0 0.0
    %394 = vmatprep.subr.mxu0 0.0
    %395 = vmatpush1.msra.mxu0 0.0
    %396 = vmatprep.subr.mxu0 0.0
    %397 = vmatpush1.msra.mxu0 0.0
    %398 = vmatprep.subr.mxu0 0.0
    %399 = vmatpush1.msra.mxu0 0.0
    %400 = vmatprep.subr.mxu0 0.0
    %401 = vmatpush1.msra.mxu0 0.0
    %402 = vmatprep.subr.mxu0 0.0
    %403 = vmatpush1.msra.mxu0 0.0
    %404 = vmatprep.subr.mxu0 0.0
    %405 = vmatpush1.msra.mxu0 0.0
    %406 = vmatprep.subr.mxu0 0.0
    %407 = vmatpush1.msra.mxu0 0.0
    %408 = vmatprep.subr.mxu0 0.0
    %409 = vmatpush1.msra.mxu0 0.0
    %410 = vmatprep.mubr.f32.mxu0 0.0
    %411 = vmatmul.mubr.f32.gmra.mrb[0].mxu0 %v344
    %v412 = vpop.f32.mrb[0].mxu0
    %v413 = vadd.f32 %v40, %v412
    %v414 = vpop.f32.mrb[0].mxu0
    %415 = vdwg.mxu0
    %v416 = vsub.f32 0.0, %v413
    %v417 = vmul.f32 %v416, 1.442695
    %v418 = vpow.pop %v417
    %v419 = vadd.f32 %v418, 1.0
    %v420 = vrcp.pop %v419
    %v421 = vmul.f32 1.0, %v420
    %v422 = vsub.f32 1.0, %v421
    %v423 = vadd.f32 %v422, 1e-07
    %v424 = vrcp.pop %v423
    %v425 = vmul.f32 %v122, %v424
    %v426 = vadd.f32 %v425, 1e-07
    %v427 = vlog2.pop %v426
    %v428 = vmul.f32 %v427, 0.6931472
    %v429 = vmul.f32 %v122, %v428
    %v430 = vadd.f32 %v421, 1e-07
    %v431 = vrcp.pop %v430
    %v432 = vmul.f32 %v121, %v431
    %v433 = vadd.f32 %v432, 1e-07
    %v434 = vlog2.pop %v433
    %v435 = vmul.f32 %v434, 0.6931472
    %v436 = vmul.f32 %v121, %v435
    %v437 = vadd.f32 %v429, %v436
    %v438 = vmul.f32 %v437, %v35
    %v439 = vsel %vm242, %v438, 0.0
    %440 = vadd.xlane.f32.xlu0 %v439
    %v441 = vpop.xlane.xlu0 %440
    %v442 = vrot.slane %v441, 4
    %v443 = vadd.f32 %v441, %v442
    %v444 = vrot.slane %v443, 2
    %v445 = vadd.f32 %v443, %v444
    %v446 = vrot.slane %v445, 1
    %v447 = vadd.f32 %v445, %v446
    %s448 = vtos %v447
    %s449 = smul.f32 %s448, 0.041666668
    %p450 = scmp.eq.s32.totalorder 0, 0
    // Predicated region
    $region22: #{tpu_custom_call.1} parent=1 // pred_check
      %p451 = pneg %p450
    $region23: #{tpu_custom_call.1} parent=1 // pred_check_branch
      %453 = sbr.rel (%p451) target = $region25
    $region24: #{tpu_custom_call.1} parent=1 // pred_region
      %s454 = scalar_lea.smem [#allocation2], 0
      %455 = sst [smem:[%s454]] 0.0
    $region25: #{tpu_custom_call.1} parent=1 // pred_fallthru
      _
    %s456 = sld [smem:[#allocation2]]
    %s457 = sadd.f32 %s456, %s449
    %s458 = scalar_lea.smem [#allocation2], 0
    %459 = sst [smem:[%s458]] %s457
    // Predicated region
    $region26: #{tpu_custom_call.1} parent=1 // pred_check
      _
    $region27: #{tpu_custom_call.1} parent=1 // pred_check_branch
      %461 = sbr.rel (0) target = $region29
    $region28: #{tpu_custom_call.1} parent=1 // pred_region
      %s463 = ssub.s32 16, 16
      %464 = vsyncadd [#allocation3], %s463
      %467 = dma.smem_to_hbm [#allocation2], 16, %s5, [#allocation3]
    $region29: #{tpu_custom_call.1} parent=1 // pred_fallthru
      _
    // Predicated region
    $region30: #{tpu_custom_call.1} parent=1 // pred_check
      _
    $region31: #{tpu_custom_call.1} parent=1 // pred_check_branch
      %469 = sbr.rel (0) target = $region33
    $region32: #{tpu_custom_call.1} parent=1 // pred_region
      %470 = dma.done [#allocation3], 16
    $region33: #{tpu_custom_call.1} parent=1 // pred_fallthru
      _
    %471 = sfence
    %472 = vsyncpa [#allocation3], 1

</llo_original>
